<compile_context>
chip_gen: v7x
topology: tpu7x:2x2x1
jax: 0.10.0
libtpu: 0.0.40
codegen_flags: <defaults>
</compile_context>

<pallas_src>
import functools
import math

import jax
import jax.numpy as jnp
from jax.experimental import pallas as pl
from jax.experimental.pallas import tpu as pltpu

_LANE_CHOICES = (512, 256, 128)       # lane-dense last-dim candidates (widest first)
_SMALL_INPUT_BYTES = 1 << 20          # below this total traffic, use plain jnp.maximum
_SPLIT_BYTES_PER_BRANCH = 2 << 20     # above this per-branch size, force a multi-step grid
_MIN_GRID_STEPS = 8                   # >= 4 pipeline steps per TensorCore on a 2-TC part
_MAX_TILE_ROWS = 4096
_DEFAULT_VMEM_CAPACITY = 64 << 20     # conservative fallback (v7x per-TC VMEM)


def _round_up(x: int, m: int) -> int:
    return -(-x // m) * m


def _vmem_budgets() -> tuple[int, int]:
    """(double-buffered working-set budget, scoped vmem limit) in bytes."""
    try:
        cap = int(pltpu.get_tpu_info().vmem_capacity_bytes)
    except Exception:
        cap = _DEFAULT_VMEM_CAPACITY
    budget = min(int(0.4 * cap), 48 << 20)          # ~25.6 MiB on v7x, 48 MiB on v5e/v6e
    limit = min(int(budget * 1.3), cap - (16 << 20))
    limit = max(limit, budget)
    return budget, limit


def _max_kernel(*refs):
    """refs = (branch_0, ..., branch_{N-1}, out); each a (tile_rows, lane_width) tile."""
    *in_refs, o_ref = refs
    acc = in_refs[0][...]
    for r in in_refs[1:]:
        acc = jnp.maximum(acc, r[...])
    o_ref[...] = acc


def _pallas_max_2d(slabs, rows, lane_width, dtype, itemsize, num_branches):
    """Elementwise max over num_branches (rows, lane_width) slabs via one pallas_call."""
    pack = {4: 8, 2: 16, 1: 32}[itemsize]           # sublane packing per dtype width
    budget, vmem_limit = _vmem_budgets()

    # Tile-row cap: (N inputs + 1 output), double-buffered, under the VMEM budget.
    cap = budget // (2 * (num_branches + 1) * lane_width * itemsize)
    cap = max(pack, (cap // pack) * pack)
    cap = min(cap, _MAX_TILE_ROWS)

    per_branch_bytes = rows * lane_width * itemsize
    if rows <= cap and per_branch_bytes <= _SPLIT_BYTES_PER_BRANCH:
        tile_rows = rows                             # single full-extent block (always legal)
    else:
        # Enough grid steps for megacore sharding + pipeline, but no divisor search:
        # cdiv grid handles a ragged last block by masking.
        split_rows = _round_up(pl.cdiv(rows, _MIN_GRID_STEPS), pack)
        tile_rows = max(pack, min(cap, split_rows))

    grid = (pl.cdiv(rows, tile_rows),)
    block = (tile_rows, lane_width)
    idx = lambda i: (i, 0)

    return pl.pallas_call(
        _max_kernel,
        out_shape=jax.ShapeDtypeStruct((rows, lane_width), dtype),
        grid_spec=pltpu.PrefetchScalarGridSpec(
            num_scalar_prefetch=0,
            grid=grid,
            in_specs=[pl.BlockSpec(block, idx) for _ in range(num_branches)],
            out_specs=pl.BlockSpec(block, idx),
        ),
        compiler_params=pltpu.CompilerParams(
            dimension_semantics=("parallel",),
            vmem_limit_bytes=vmem_limit,
        ),
        cost_estimate=pl.CostEstimate(
            flops=(num_branches - 1) * rows * lane_width,
            transcendentals=0,
            bytes_accessed=(num_branches + 1) * rows * lane_width * itemsize,
        ),
    )(*slabs)


def max_output(branch_tensors: dict[int, jax.Array]) -> jax.Array:
    """Elementwise max over the dict's tensors (all must share shape/dtype)."""
    tensors = list(branch_tensors.values())
    assert len(tensors) >= 1
    orig_shape = tensors[0].shape
    dtype = tensors[0].dtype
    for t in tensors:
        assert t.shape == orig_shape and t.dtype == dtype

    num_branches = len(tensors)
    if num_branches == 1:
        return tensors[0]

    itemsize = jnp.dtype(dtype).itemsize
    assert itemsize in (1, 2, 4), f"unsupported dtype for MaxOutput kernel: {dtype}"

    total = math.prod(orig_shape)

    # Small-input fast path: pallas_call fixed cost dominates; let XLA fuse the chain.
    if (num_branches + 1) * total * itemsize < _SMALL_INPUT_BYTES:
        return functools.reduce(jnp.maximum, tensors)

    # Lane-dense slab layout: widest lane width dividing the payload, else 128 + tail.
    lane_width = next((lw for lw in _LANE_CHOICES if total % lw == 0), 128)
    aligned = (total // lane_width) * lane_width
    if aligned == 0:
        return functools.reduce(jnp.maximum, tensors)

    flats = [t.reshape(-1) for t in tensors]
    rows = aligned // lane_width
    if aligned == total:
        slabs = [f.reshape(rows, lane_width) for f in flats]
    else:
        slabs = [f[:aligned].reshape(rows, lane_width) for f in flats]

    out = _pallas_max_2d(slabs, rows, lane_width, dtype, itemsize, num_branches)
    out_flat = out.reshape(aligned)

    if aligned != total:
        # Ragged tail (< lane_width elements): plain VPU max, no full-array padding.
        tail = functools.reduce(jnp.maximum, [f[aligned:] for f in flats])
        out_flat = jnp.concatenate([out_flat, tail])

    return out_flat.reshape(orig_shape)


if __name__ == "__main__":
    def ref_max(bt):
        return jnp.max(jnp.stack(list(bt.values()), axis=-1), axis=-1)

    # 1) Module-spec small example (NCHW conv-style output) -> small-input fast path.
    B, C, H, W = 2, 4, 16, 16
    num_branches = 3
    keys = jax.random.split(jax.random.PRNGKey(0), num_branches)
    small = {i: jax.random.normal(keys[i], (B, C, H, W), dtype=jnp.float32)
             for i in range(num_branches)}
    out_small = max_output(small)
    jax.block_until_ready(out_small)
    assert out_small.shape == (B, C, H, W)
    assert jnp.array_equal(out_small, ref_max(small))

    # 2) Larger lane-aligned payload -> Pallas kernel, multi-step grid with a masked
    #    ragged last block (rows not divisible by tile_rows).
    keys = jax.random.split(jax.random.PRNGKey(1), 3)
    big = {i: jax.random.normal(keys[i], (4, 9, 160, 128), dtype=jnp.float32)
           for i in range(3)}
    out_big = max_output(big)
    jax.block_until_ready(out_big)
    assert jnp.array_equal(out_big, ref_max(big))

    # 3) Ragged payload (total % 128 != 0) -> kernel on aligned prefix + plain tail.
    keys = jax.random.split(jax.random.PRNGKey(2), 3)
    ragged = {i: jax.random.normal(keys[i], (3, 7, 97, 131), dtype=jnp.float32)
              for i in range(3)}
    out_rag = max_output(ragged)
    jax.block_until_ready(out_rag)
    assert jnp.array_equal(out_rag, ref_max(ragged))

    print("KERNEL_OK")
</pallas_src>

<mosaic_0001>
module attributes {stable_mosaic.version = 11 : i64} {
  func.func @_max_kernel(%arg0: i32, %arg1: memref<184x512xf32, #tpu.memory_space<vmem>>, %arg2: memref<184x512xf32, #tpu.memory_space<vmem>>, %arg3: memref<184x512xf32, #tpu.memory_space<vmem>>, %arg4: memref<184x512xf32, #tpu.memory_space<vmem>>) attributes {dimension_semantics = [#tpu.dimension_semantics<parallel>], iteration_bounds = array<i64: 8>, scalar_prefetch = 0 : i64, scratch_operands = 0 : i64, tpu.core_type = #tpu.core_type<tc>, window_params = [{transform_indices = @transform_0, window_bounds = array<i64: 184, 512>}, {transform_indices = @transform_1, window_bounds = array<i64: 184, 512>}, {transform_indices = @transform_2, window_bounds = array<i64: 184, 512>}, {transform_indices = @transform_3, window_bounds = array<i64: 184, 512>}]} {
    %c0 = arith.constant 0 : index
    %c0_0 = arith.constant 0 : index
    %0 = vector.load %arg1[%c0, %c0_0] : memref<184x512xf32, #tpu.memory_space<vmem>>, vector<184x512xf32>
    %c0_1 = arith.constant 0 : index
    %c0_2 = arith.constant 0 : index
    %1 = vector.load %arg2[%c0_1, %c0_2] : memref<184x512xf32, #tpu.memory_space<vmem>>, vector<184x512xf32>
    %2 = arith.maximumf %0, %1 : vector<184x512xf32>
    %c0_3 = arith.constant 0 : index
    %c0_4 = arith.constant 0 : index
    %3 = vector.load %arg3[%c0_3, %c0_4] : memref<184x512xf32, #tpu.memory_space<vmem>>, vector<184x512xf32>
    %4 = arith.maximumf %2, %3 : vector<184x512xf32>
    %c0_5 = arith.constant 0 : index
    %c0_6 = arith.constant 0 : index
    %5 = vector.load %arg4[%c0_5, %c0_6] : memref<184x512xf32, #tpu.memory_space<vmem>>, vector<184x512xf32>
    tpu.vector_store %arg4[%c0_5, %c0_6], %4 {strides = array<i32>} : memref<184x512xf32, #tpu.memory_space<vmem>>, vector<184x512xf32>,
    return
  }
  func.func @transform_0(%arg0: i32) -> (i32, i32) {
    %c0_i32 = arith.constant 0 : i32
    %c0_i32_0 = arith.constant 0 : i32
    return %arg0, %c0_i32 : i32, i32
  }
  func.func @transform_1(%arg0: i32) -> (i32, i32) {
    %c0_i32 = arith.constant 0 : i32
    %c0_i32_0 = arith.constant 0 : i32
    return %arg0, %c0_i32 : i32, i32
  }
  func.func @transform_2(%arg0: i32) -> (i32, i32) {
    %c0_i32 = arith.constant 0 : i32
    %c0_i32_0 = arith.constant 0 : i32
    return %arg0, %c0_i32 : i32, i32
  }
  func.func @transform_3(%arg0: i32) -> (i32, i32) {
    %c0_i32 = arith.constant 0 : i32
    %c0_i32_0 = arith.constant 0 : i32
    return %arg0, %c0_i32 : i32, i32
  }
}

</mosaic_0001>

<llo_original>
// kernel: tpu_custom_call.1
$region0: #{tpu_custom_call.1}
  #allocation0 [shape = 'u32[]', space=smem, size = 0x4, offset = 0x4, fixed_abs, tag = 'smem constant byte address 0x4 - core index']
  #allocation1 [shape = 'u32[144,128]{1,0:T(1,128)}', space=vmem, size = 0x12000, scoped, tag = 'internal scratch']
  %s0 = inlined_call_operand.hbm [shape: f32[1440,512], index: 0, kind: input, shape index: {}]
  %s1 = inlined_call_operand.hbm [shape: f32[1440,512], index: 1, kind: input, shape index: {}]
  %s2 = inlined_call_operand.hbm [shape: f32[1440,512], index: 2, kind: input, shape index: {}]
  %s3 = inlined_call_operand.hbm [shape: f32[1440,512], index: 3, kind: output, shape index: {}]
  %s4 = sld [smem:[#allocation0]]
  $region57: #{tpu_custom_call.1} parent=0
    _
  %s6 = ssub.s32 1, %s4
  %s7 = scalar_select 0, %s6, %s4
  $region1: #{tpu_custom_call.1} parent=0
    #allocation2 [shape = 'u8[753664]{0}', space=vmem, size = 0xb8000, scoped, tag = 'input window, operand 0']
    #allocation3 [shape = 's32[2]{0}', space=sflag, size = 0x8, scoped, tag = 'scoped memory for tpu_custom_call.1']
    #allocation4 [shape = 's32[2]{0}', space=sflag, size = 0x8, scoped, tag = 'scoped memory for tpu_custom_call.1']
    #allocation5 [shape = 'u8[753664]{0}', space=vmem, size = 0xb8000, scoped, tag = 'input window, operand 1']
    #allocation6 [shape = 's32[2]{0}', space=sflag, size = 0x8, scoped, tag = 'scoped memory for tpu_custom_call.1']
    #allocation7 [shape = 'u8[753664]{0}', space=vmem, size = 0xb8000, scoped, tag = 'input window, operand 2']
    #allocation8 [shape = 'u8[753664]{0}', space=vmem, size = 0xb8000, scoped, tag = 'output window, operand 0']
    %8 = vsyncpa [#allocation3], 0
    %s9 = scalar_lea.sflag [#allocation3], 1
    %10 = vsyncpa %s9, 0
    %11 = vsyncpa [#allocation6], 0
    %s12 = scalar_lea.sflag [#allocation6], 1
    %13 = vsyncpa %s12, 0
    %14 = vsyncpa [#allocation4], 0
    %s15 = scalar_lea.sflag [#allocation4], 1
    %16 = vsyncpa %s15, 0
    loop: start=0, step=1, limit=10
    $region2: #{tpu_custom_call.1} parent=1 // loop_pre_header
      _
    $region3: #{tpu_custom_call.1} parent=1 // loop_header
      %s18 = sphi 0, %s22
      %p19 = scmp.ge.s32.totalorder %s18, 10
      %s28 = sphi 0, %s30
      %s31 = sphi 0, %s28
      %s32 = sphi 0, %s31
      %s48 = sphi 0, %s32
      %s54 = sphi 0, %s56
      %s57 = sphi 0, %s54
      %s58 = sphi 0, %s57
      %s74 = sphi 0, %s58
      %s80 = sphi 0, %s82
      %s83 = sphi 0, %s80
      %s84 = sphi 0, %s83
      %s100 = sphi 0, %s84
      %s106 = sphi 0, %s108
      %s109 = sphi 0, %s106
      %s110 = sphi 0, %s109
      %s126 = sphi 0, %s110
    $region4: #{tpu_custom_call.1} parent=1 // loop_header_branch
      %21 = sbr.rel (%p19) target = $region8
    $region5: #{tpu_custom_call.1} parent=1 // loop_body
      %s23 = ssub.s32 %s18, 1
      %s24 = ssub.s32 %s18, 2
      %s25 = sadd.s32 %s18, 1
      %s26 = ssub.s32 %s18, %s25
      %p27 = scmp.eq.s32.totalorder %s26, 0
      %s29 = sadd.s32 %s28, 1
      %s30 = scalar_select %p27, %s28, %s29
      %p33 = pneg %p27
      %p34 = scmp.eq.s32.totalorder %s18, 7
      %p35 = por %p33, %p34
      %p36 = scmp.ne.s32.totalorder %s28, %s31
      %p37 = scmp.eq.s32.totalorder %s18, 0
      %p38 = por %p36, %p37
      %p39 = scmp.ne.s32.totalorder %s28, %s31
      %p40 = scmp.eq.s32.totalorder %s23, 7
      %p41 = por %p39, %p40
      %p42 = scmp.ne.s32.totalorder %s31, %s32
      %p43 = scmp.eq.s32.totalorder %s23, 0
      %p44 = por %p42, %p43
      %p45 = scmp.ne.s32.totalorder %s31, %s32
      %p46 = scmp.eq.s32.totalorder %s24, 7
      %p47 = por %p45, %p46
      %p49 = scmp.ne.s32.totalorder %s32, %s48
      %p50 = scmp.eq.s32.totalorder %s24, 0
      %p51 = por %p49, %p50
      %s52 = ssub.s32 %s18, %s25
      %p53 = scmp.eq.s32.totalorder %s52, 0
      %s55 = sadd.s32 %s54, 1
      %s56 = scalar_select %p53, %s54, %s55
      %p59 = pneg %p53
      %p60 = scmp.eq.s32.totalorder %s18, 7
      %p61 = por %p59, %p60
      %p62 = scmp.ne.s32.totalorder %s54, %s57
      %p63 = scmp.eq.s32.totalorder %s18, 0
      %p64 = por %p62, %p63
      %p65 = scmp.ne.s32.totalorder %s54, %s57
      %p66 = scmp.eq.s32.totalorder %s23, 7
      %p67 = por %p65, %p66
      %p68 = scmp.ne.s32.totalorder %s57, %s58
      %p69 = scmp.eq.s32.totalorder %s23, 0
      %p70 = por %p68, %p69
      %p71 = scmp.ne.s32.totalorder %s57, %s58
      %p72 = scmp.eq.s32.totalorder %s24, 7
      %p73 = por %p71, %p72
      %p75 = scmp.ne.s32.totalorder %s58, %s74
      %p76 = scmp.eq.s32.totalorder %s24, 0
      %p77 = por %p75, %p76
      %s78 = ssub.s32 %s18, %s25
      %p79 = scmp.eq.s32.totalorder %s78, 0
      %s81 = sadd.s32 %s80, 1
      %s82 = scalar_select %p79, %s80, %s81
      %p85 = pneg %p79
      %p86 = scmp.eq.s32.totalorder %s18, 7
      %p87 = por %p85, %p86
      %p88 = scmp.ne.s32.totalorder %s80, %s83
      %p89 = scmp.eq.s32.totalorder %s18, 0
      %p90 = por %p88, %p89
      %p91 = scmp.ne.s32.totalorder %s80, %s83
      %p92 = scmp.eq.s32.totalorder %s23, 7
      %p93 = por %p91, %p92
      %p94 = scmp.ne.s32.totalorder %s83, %s84
      %p95 = scmp.eq.s32.totalorder %s23, 0
      %p96 = por %p94, %p95
      %p97 = scmp.ne.s32.totalorder %s83, %s84
      %p98 = scmp.eq.s32.totalorder %s24, 7
      %p99 = por %p97, %p98
      %p101 = scmp.ne.s32.totalorder %s84, %s100
      %p102 = scmp.eq.s32.totalorder %s24, 0
      %p103 = por %p101, %p102
      %s104 = ssub.s32 %s18, %s25
      %p105 = scmp.eq.s32.totalorder %s104, 0
      %s107 = sadd.s32 %s106, 1
      %s108 = scalar_select %p105, %s106, %s107
      %p111 = pneg %p105
      %p112 = scmp.eq.s32.totalorder %s18, 7
      %p113 = por %p111, %p112
      %p114 = scmp.ne.s32.totalorder %s106, %s109
      %p115 = scmp.eq.s32.totalorder %s18, 0
      %p116 = por %p114, %p115
      %p117 = scmp.ne.s32.totalorder %s106, %s109
      %p118 = scmp.eq.s32.totalorder %s23, 7
      %p119 = por %p117, %p118
      %p120 = scmp.ne.s32.totalorder %s109, %s110
      %p121 = scmp.eq.s32.totalorder %s23, 0
      %p122 = por %p120, %p121
      %p123 = scmp.ne.s32.totalorder %s109, %s110
      %p124 = scmp.eq.s32.totalorder %s24, 7
      %p125 = por %p123, %p124
      %p127 = scmp.ne.s32.totalorder %s110, %s126
      %p128 = scmp.eq.s32.totalorder %s24, 0
      %p129 = por %p127, %p128
      %p130 = scmp.le.s32.totalorder 1, %s18
      %p131 = scmp.lt.s32.totalorder %s18, 9
      %p132 = pnand %p130, %p131
      %p133 = pneg %p132
      // Predicated region
      $region9: #{tpu_custom_call.1} parent=5 // pred_check
        _
      $region10: #{tpu_custom_call.1} parent=5 // pred_check_branch
        %135 = sbr.rel (%p132) target = $region12
      $region11: #{tpu_custom_call.1} parent=5 // pred_region
        %s136 = ssub.s32 %s18, 1
      $region12: #{tpu_custom_call.1} parent=5 // pred_fallthru
        _
      %p137 = scmp.lt.s32.totalorder %s18, 8
      // Predicated region
      $region13: #{tpu_custom_call.1} parent=5 // pred_check
        %p138 = pneg %p137
      $region14: #{tpu_custom_call.1} parent=5 // pred_check_branch
        %140 = sbr.rel (%p138) target = $region16
      $region15: #{tpu_custom_call.1} parent=5 // pred_region
        // Predicated region
        $region17: #{tpu_custom_call.1} parent=15 // pred_check
          %p141 = pneg %p38
        $region18: #{tpu_custom_call.1} parent=15 // pred_check_branch
          %143 = sbr.rel (%p141) target = $region20
        $region19: #{tpu_custom_call.1} parent=15 // pred_region
          %s144 = sand.u32 %s28, 1
          %s145 = scalar_lea.sflag [#allocation3], %s144
          %s146 = sand.u32 %s28, 1
          %s147 = smul.addr %s146, 736
          %s148 = scalar_lea.vmem [#allocation2], %s147
          %s149 = smul.u32 23, %s18
          %s150 = ssub.s32 180, %s149
          %p151 = scmp.lt.s32.totalorder %s150, 23
          %s152 = scalar_select %p151, %s150, 23
          %s153 = smul.u32 128, %s152
          %s154 = smul.u32 %s153, 4
          %s156 = ssub.s32 11776, %s154
          %157 = vsyncadd %s145, %s156
          %p158 = scmp.ne.s32.totalorder 0, %s154
          %s159 = smul.addr %s149, 4
          %s160 = smul.addr %s159, 128
          %s161 = scalar_lea.hbm %s0, %s160
          %s162 = smul.u32 32, %s152
          %s163 = sshll.u32 %s148, 4
          %s164 = int_to_ptr.vmem [resolvable:$true] %s163
          %s165 = sshll.u32 %s162, 4
          %169 = dma.hbm_to_vmem [thread:$0]  (%p158), %s161, %s165, %s164, %s145, 512, 512, 32
        $region20: #{tpu_custom_call.1} parent=15 // pred_fallthru
          _
        // Predicated region
        $region21: #{tpu_custom_call.1} parent=15 // pred_check
          %p170 = pneg %p64
        $region22: #{tpu_custom_call.1} parent=15 // pred_check_branch
          %172 = sbr.rel (%p170) target = $region24
        $region23: #{tpu_custom_call.1} parent=15 // pred_region
          %s173 = sand.u32 %s18, 1
          %s174 = scalar_lea.sflag [#allocation6], %s173
          %s175 = sand.u32 %s54, 1
          %s176 = smul.addr %s175, 736
          %s177 = scalar_lea.vmem [#allocation5], %s176
          %s178 = smul.u32 23, %s18
          %s179 = ssub.s32 180, %s178
          %p180 = scmp.lt.s32.totalorder %s179, 23
          %s181 = scalar_select %p180, %s179, 23
          %s182 = smul.u32 128, %s181
          %s183 = smul.u32 %s182, 4
          %s185 = ssub.s32 11776, %s183
          %186 = vsyncadd %s174, %s185
          %p187 = scmp.ne.s32.totalorder 0, %s183
          %s188 = smul.addr %s178, 4
          %s189 = smul.addr %s188, 128
          %s190 = scalar_lea.hbm %s1, %s189
          %s191 = smul.u32 32, %s181
          %s192 = sshll.u32 %s177, 4
          %s193 = int_to_ptr.vmem [resolvable:$true] %s192
          %s194 = sshll.u32 %s191, 4
          %198 = dma.hbm_to_vmem [thread:$0]  (%p187), %s190, %s194, %s193, %s174, 512, 512, 32
        $region24: #{tpu_custom_call.1} parent=15 // pred_fallthru
          _
        // Predicated region
        $region25: #{tpu_custom_call.1} parent=15 // pred_check
          %p199 = pneg %p90
        $region26: #{tpu_custom_call.1} parent=15 // pred_check_branch
          %201 = sbr.rel (%p199) target = $region28
        $region27: #{tpu_custom_call.1} parent=15 // pred_region
          %s202 = sand.u32 %s18, 1
          %s203 = scalar_lea.sflag [#allocation6], %s202
          %s204 = sand.u32 %s80, 1
          %s205 = smul.addr %s204, 736
          %s206 = scalar_lea.vmem [#allocation7], %s205
          %s207 = smul.u32 23, %s18
          %s208 = ssub.s32 180, %s207
          %p209 = scmp.lt.s32.totalorder %s208, 23
          %s210 = scalar_select %p209, %s208, 23
          %s211 = smul.u32 128, %s210
          %s212 = smul.u32 %s211, 4
          %s214 = ssub.s32 11776, %s212
          %215 = vsyncadd %s203, %s214
          %p216 = scmp.ne.s32.totalorder 0, %s212
          %s217 = smul.addr %s207, 4
          %s218 = smul.addr %s217, 128
          %s219 = scalar_lea.hbm %s2, %s218
          %s220 = smul.u32 32, %s210
          %s221 = sshll.u32 %s206, 4
          %s222 = int_to_ptr.vmem [resolvable:$true] %s221
          %s223 = sshll.u32 %s220, 4
          %227 = dma.hbm_to_vmem [thread:$0]  (%p216), %s219, %s223, %s222, %s203, 512, 512, 32
        $region28: #{tpu_custom_call.1} parent=15 // pred_fallthru
          _
      $region16: #{tpu_custom_call.1} parent=5 // pred_fallthru
        _
      %p228 = scmp.le.s32.totalorder 1, %s18
      %p229 = scmp.lt.s32.totalorder %s18, 9
      %p230 = pnand %p228, %p229
      %p231 = pneg %p230
      // Predicated region
      $region29: #{tpu_custom_call.1} parent=5 // pred_check
        _
      $region30: #{tpu_custom_call.1} parent=5 // pred_check_branch
        %233 = sbr.rel (%p230) target = $region32
      $region31: #{tpu_custom_call.1} parent=5 // pred_region
        %s234 = ssub.s32 %s18, 1
        %s235 = sand.u32 %s31, 1
        %s236 = scalar_lea.sflag [#allocation3], %s235
        %s237 = sand.u32 %s31, 1
        %s238 = smul.addr %s237, 736
        %s239 = scalar_lea.vmem [#allocation2], %s238
        // Predicated region
        $region33: #{tpu_custom_call.1} parent=31 // pred_check
          %p240 = pneg %p44
        $region34: #{tpu_custom_call.1} parent=31 // pred_check_branch
          %242 = sbr.rel (%p240) target = $region36
        $region35: #{tpu_custom_call.1} parent=31 // pred_region
          %243 = dma.done %s236, 11776
        $region36: #{tpu_custom_call.1} parent=31 // pred_fallthru
          _
        %s244 = sand.u32 %s23, 1
        %s245 = scalar_lea.sflag [#allocation6], %s244
        %s246 = sand.u32 %s57, 1
        %s247 = smul.addr %s246, 736
        %s248 = scalar_lea.vmem [#allocation5], %s247
        // Predicated region
        $region37: #{tpu_custom_call.1} parent=31 // pred_check
          %p249 = pneg %p70
        $region38: #{tpu_custom_call.1} parent=31 // pred_check_branch
          %251 = sbr.rel (%p249) target = $region40
        $region39: #{tpu_custom_call.1} parent=31 // pred_region
          %252 = dma.done %s245, 11776
        $region40: #{tpu_custom_call.1} parent=31 // pred_fallthru
          _
        %s253 = sand.u32 %s23, 1
        %s254 = scalar_lea.sflag [#allocation6], %s253
        %s255 = sand.u32 %s83, 1
        %s256 = smul.addr %s255, 736
        %s257 = scalar_lea.vmem [#allocation7], %s256
        // Predicated region
        $region41: #{tpu_custom_call.1} parent=31 // pred_check
          %p258 = pneg %p96
        $region42: #{tpu_custom_call.1} parent=31 // pred_check_branch
          %260 = sbr.rel (%p258) target = $region44
        $region43: #{tpu_custom_call.1} parent=31 // pred_region
          %261 = dma.done %s254, 11776
        $region44: #{tpu_custom_call.1} parent=31 // pred_fallthru
          _
        %s262 = sand.u32 %s31, 1
        %s263 = scalar_lea.sflag [#allocation3], %s262
        %s264 = sand.u32 %s31, 1
        %s265 = smul.addr %s264, 736
        %s266 = scalar_lea.vmem [#allocation2], %s265
        %p267 = pneg %p44
        %p268 = pneg %p41
        %s269 = sand.u32 %s23, 1
        %s270 = scalar_lea.sflag [#allocation6], %s269
        %s271 = sand.u32 %s57, 1
        %s272 = smul.addr %s271, 736
        %s273 = scalar_lea.vmem [#allocation5], %s272
        %p274 = pneg %p70
        %p275 = pneg %p67
        %s276 = sand.u32 %s23, 1
        %s277 = scalar_lea.sflag [#allocation6], %s276
        %s278 = sand.u32 %s83, 1
        %s279 = smul.addr %s278, 736
        %s280 = scalar_lea.vmem [#allocation7], %s279
        %p281 = pneg %p96
        %p282 = pneg %p93
        %p283 = pneg %p122
        %p284 = pneg %p119
        %s285 = sand.u32 %s109, 1
        %s286 = scalar_lea.sflag [#allocation4], %s285
        %s287 = sand.u32 %s109, 1
        %s288 = smul.addr %s287, 736
        %s289 = scalar_lea.vmem [#allocation8], %s288
        %s290 = smul.u32 23, %s23
        %s291 = ssub.s32 180, %s290
        %p292 = scmp.lt.s32.totalorder %s291, 23
        %s293 = scalar_select %p292, %s291, 23
        %s294 = smul.u32 128, %s293
        %s295 = smul.u32 %s294, 4
        %s296 = smul.u32 23, %s23
        %s297 = ssub.s32 180, %s296
        %p298 = scmp.lt.s32.totalorder %s297, 23
        %s299 = scalar_select %p298, %s297, 23
        %s300 = smul.u32 128, %s299
        %s301 = smul.u32 %s300, 4
        %s302 = smul.u32 23, %s23
        %s303 = ssub.s32 180, %s302
        %p304 = scmp.lt.s32.totalorder %s303, 23
        %s305 = scalar_select %p304, %s303, 23
        %s306 = smul.u32 128, %s305
        %s307 = smul.u32 %s306, 4
        %s308 = smul.u32 23, %s23
        %s309 = ssub.s32 180, %s308
        %p310 = scmp.lt.s32.totalorder %s309, 23
        %s311 = scalar_select %p310, %s309, 23
        %s312 = smul.u32 128, %s311
        %s313 = smul.u32 %s312, 4
        %v314 = vld [vmem:[%s239] sm:$0xff]
        %v315 = vld [vmem:[%s239 + $0x8] sm:$0xff]
        %v316 = vld [vmem:[%s239 + $0x10] sm:$0xff]
        %v317 = vld [vmem:[%s239 + $0x18] sm:$0xff]
        %v318 = vld [vmem:[%s239 + $0x20] sm:$0xff]
        %v319 = vld [vmem:[%s239 + $0x28] sm:$0xff]
        %v320 = vld [vmem:[%s239 + $0x30] sm:$0xff]
        %v321 = vld [vmem:[%s239 + $0x38] sm:$0xff]
        %v322 = vld [vmem:[%s239 + $0x40] sm:$0xff]
        %v323 = vld [vmem:[%s239 + $0x48] sm:$0xff]
        %v324 = vld [vmem:[%s239 + $0x50] sm:$0xff]
        %v325 = vld [vmem:[%s239 + $0x58] sm:$0xff]
        %v326 = vld [vmem:[%s239 + $0x60] sm:$0xff]
        %v327 = vld [vmem:[%s239 + $0x68] sm:$0xff]
        %v328 = vld [vmem:[%s239 + $0x70] sm:$0xff]
        %v329 = vld [vmem:[%s239 + $0x78] sm:$0xff]
        %v330 = vld [vmem:[%s239 + $0x80] sm:$0xff]
        %v331 = vld [vmem:[%s239 + $0x88] sm:$0xff]
        %v332 = vld [vmem:[%s239 + $0x90] sm:$0xff]
        %v333 = vld [vmem:[%s239 + $0x98] sm:$0xff]
        %v334 = vld [vmem:[%s239 + $0xa0] sm:$0xff]
        %v335 = vld [vmem:[%s239 + $0xa8] sm:$0xff]
        %v336 = vld [vmem:[%s239 + $0xb0] sm:$0xff]
        %v337 = vld [vmem:[%s239 + $0xb8] sm:$0xff]
        %v338 = vld [vmem:[%s239 + $0xc0] sm:$0xff]
        %v339 = vld [vmem:[%s239 + $0xc8] sm:$0xff]
        %v340 = vld [vmem:[%s239 + $0xd0] sm:$0xff]
        %v341 = vld [vmem:[%s239 + $0xd8] sm:$0xff]
        %v342 = vld [vmem:[%s239 + $0xe0] sm:$0xff]
        %v343 = vld [vmem:[%s239 + $0xe8] sm:$0xff]
        %v344 = vld [vmem:[%s239 + $0xf0] sm:$0xff]
        %v345 = vld [vmem:[%s239 + $0xf8] sm:$0xff]
        %v346 = vld [vmem:[%s239 + $0x100] sm:$0xff]
        %v347 = vld [vmem:[%s239 + $0x108] sm:$0xff]
        %v348 = vld [vmem:[%s239 + $0x110] sm:$0xff]
        %v349 = vld [vmem:[%s239 + $0x118] sm:$0xff]
        %v350 = vld [vmem:[%s239 + $0x120] sm:$0xff]
        %v351 = vld [vmem:[%s239 + $0x128] sm:$0xff]
        %v352 = vld [vmem:[%s239 + $0x130] sm:$0xff]
        %v353 = vld [vmem:[%s239 + $0x138] sm:$0xff]
        %v354 = vld [vmem:[%s239 + $0x140] sm:$0xff]
        %v355 = vld [vmem:[%s239 + $0x148] sm:$0xff]
        %v356 = vld [vmem:[%s239 + $0x150] sm:$0xff]
        %v357 = vld [vmem:[%s239 + $0x158] sm:$0xff]
        %v358 = vld [vmem:[%s239 + $0x160] sm:$0xff]
        %v359 = vld [vmem:[%s239 + $0x168] sm:$0xff]
        %v360 = vld [vmem:[%s239 + $0x170] sm:$0xff]
        %v361 = vld [vmem:[%s239 + $0x178] sm:$0xff]
        %v362 = vld [vmem:[%s239 + $0x180] sm:$0xff]
        %v363 = vld [vmem:[%s239 + $0x188] sm:$0xff]
        %v364 = vld [vmem:[%s239 + $0x190] sm:$0xff]
        %v365 = vld [vmem:[%s239 + $0x198] sm:$0xff]
        %v366 = vld [vmem:[%s239 + $0x1a0] sm:$0xff]
        %v367 = vld [vmem:[%s239 + $0x1a8] sm:$0xff]
        %v368 = vld [vmem:[%s239 + $0x1b0] sm:$0xff]
        %v369 = vld [vmem:[%s239 + $0x1b8] sm:$0xff]
        %v370 = vld [vmem:[%s239 + $0x1c0] sm:$0xff]
        %v371 = vld [vmem:[%s239 + $0x1c8] sm:$0xff]
        %v372 = vld [vmem:[%s239 + $0x1d0] sm:$0xff]
        %v373 = vld [vmem:[%s239 + $0x1d8] sm:$0xff]
        %v374 = vld [vmem:[%s239 + $0x1e0] sm:$0xff]
        %v375 = vld [vmem:[%s239 + $0x1e8] sm:$0xff]
        %v376 = vld [vmem:[%s239 + $0x1f0] sm:$0xff]
        %v377 = vld [vmem:[%s239 + $0x1f8] sm:$0xff]
        %v378 = vld [vmem:[%s239 + $0x200] sm:$0xff]
        %v379 = vld [vmem:[%s239 + $0x208] sm:$0xff]
        %v380 = vld [vmem:[%s239 + $0x210] sm:$0xff]
        %v381 = vld [vmem:[%s239 + $0x218] sm:$0xff]
        %v382 = vld [vmem:[%s239 + $0x220] sm:$0xff]
        %v383 = vld [vmem:[%s239 + $0x228] sm:$0xff]
        %v384 = vld [vmem:[%s239 + $0x230] sm:$0xff]
        %v385 = vld [vmem:[%s239 + $0x238] sm:$0xff]
        %v386 = vld [vmem:[%s239 + $0x240] sm:$0xff]
        %v387 = vld [vmem:[%s239 + $0x248] sm:$0xff]
        %v388 = vld [vmem:[%s239 + $0x250] sm:$0xff]
        %v389 = vld [vmem:[%s239 + $0x258] sm:$0xff]
        %v390 = vld [vmem:[%s239 + $0x260] sm:$0xff]
        %v391 = vld [vmem:[%s239 + $0x268] sm:$0xff]
        %v392 = vld [vmem:[%s239 + $0x270] sm:$0xff]
        %v393 = vld [vmem:[%s239 + $0x278] sm:$0xff]
        %v394 = vld [vmem:[%s239 + $0x280] sm:$0xff]
        %v395 = vld [vmem:[%s239 + $0x288] sm:$0xff]
        %v396 = vld [vmem:[%s239 + $0x290] sm:$0xff]
        %v397 = vld [vmem:[%s239 + $0x298] sm:$0xff]
        %v398 = vld [vmem:[%s239 + $0x2a0] sm:$0xff]
        %v399 = vld [vmem:[%s239 + $0x2a8] sm:$0xff]
        %v400 = vld [vmem:[%s239 + $0x2b0] sm:$0xff]
        %v401 = vld [vmem:[%s239 + $0x2b8] sm:$0xff]
        %v402 = vld [vmem:[%s239 + $0x2c0] sm:$0xff]
        %v403 = vld [vmem:[%s239 + $0x2c8] sm:$0xff]
        %v404 = vld [vmem:[%s239 + $0x2d0] sm:$0xff]
        %v405 = vld [vmem:[%s239 + $0x2d8] sm:$0xff]
        %v406 = vld [vmem:[%s248] sm:$0xff]
        %v407 = vld [vmem:[%s248 + $0x8] sm:$0xff]
        %v408 = vld [vmem:[%s248 + $0x10] sm:$0xff]
        %v409 = vld [vmem:[%s248 + $0x18] sm:$0xff]
        %v410 = vld [vmem:[%s248 + $0x20] sm:$0xff]
        %v411 = vld [vmem:[%s248 + $0x28] sm:$0xff]
        %v412 = vld [vmem:[%s248 + $0x30] sm:$0xff]
        %v413 = vld [vmem:[%s248 + $0x38] sm:$0xff]
        %v414 = vld [vmem:[%s248 + $0x40] sm:$0xff]
        %v415 = vld [vmem:[%s248 + $0x48] sm:$0xff]
        %v416 = vld [vmem:[%s248 + $0x50] sm:$0xff]
        %v417 = vld [vmem:[%s248 + $0x58] sm:$0xff]
        %v418 = vld [vmem:[%s248 + $0x60] sm:$0xff]
        %v419 = vld [vmem:[%s248 + $0x68] sm:$0xff]
        %v420 = vld [vmem:[%s248 + $0x70] sm:$0xff]
        %v421 = vld [vmem:[%s248 + $0x78] sm:$0xff]
        %v422 = vld [vmem:[%s248 + $0x80] sm:$0xff]
        %v423 = vld [vmem:[%s248 + $0x88] sm:$0xff]
        %v424 = vld [vmem:[%s248 + $0x90] sm:$0xff]
        %v425 = vld [vmem:[%s248 + $0x98] sm:$0xff]
        %v426 = vld [vmem:[%s248 + $0xa0] sm:$0xff]
        %v427 = vld [vmem:[%s248 + $0xa8] sm:$0xff]
        %v428 = vld [vmem:[%s248 + $0xb0] sm:$0xff]
        %v429 = vld [vmem:[%s248 + $0xb8] sm:$0xff]
        %v430 = vld [vmem:[%s248 + $0xc0] sm:$0xff]
        %v431 = vld [vmem:[%s248 + $0xc8] sm:$0xff]
        %v432 = vld [vmem:[%s248 + $0xd0] sm:$0xff]
        %v433 = vld [vmem:[%s248 + $0xd8] sm:$0xff]
        %v434 = vld [vmem:[%s248 + $0xe0] sm:$0xff]
        %v435 = vld [vmem:[%s248 + $0xe8] sm:$0xff]
        %v436 = vld [vmem:[%s248 + $0xf0] sm:$0xff]
        %v437 = vld [vmem:[%s248 + $0xf8] sm:$0xff]
        %v438 = vld [vmem:[%s248 + $0x100] sm:$0xff]
        %v439 = vld [vmem:[%s248 + $0x108] sm:$0xff]
        %v440 = vld [vmem:[%s248 + $0x110] sm:$0xff]
        %v441 = vld [vmem:[%s248 + $0x118] sm:$0xff]
        %v442 = vld [vmem:[%s248 + $0x120] sm:$0xff]
        %v443 = vld [vmem:[%s248 + $0x128] sm:$0xff]
        %v444 = vld [vmem:[%s248 + $0x130] sm:$0xff]
        %v445 = vld [vmem:[%s248 + $0x138] sm:$0xff]
        %v446 = vld [vmem:[%s248 + $0x140] sm:$0xff]
        %v447 = vld [vmem:[%s248 + $0x148] sm:$0xff]
        %v448 = vld [vmem:[%s248 + $0x150] sm:$0xff]
        %v449 = vld [vmem:[%s248 + $0x158] sm:$0xff]
        %v450 = vld [vmem:[%s248 + $0x160] sm:$0xff]
        %v451 = vld [vmem:[%s248 + $0x168] sm:$0xff]
        %v452 = vld [vmem:[%s248 + $0x170] sm:$0xff]
        %v453 = vld [vmem:[%s248 + $0x178] sm:$0xff]
        %v454 = vld [vmem:[%s248 + $0x180] sm:$0xff]
        %v455 = vld [vmem:[%s248 + $0x188] sm:$0xff]
        %v456 = vld [vmem:[%s248 + $0x190] sm:$0xff]
        %v457 = vld [vmem:[%s248 + $0x198] sm:$0xff]
        %v458 = vld [vmem:[%s248 + $0x1a0] sm:$0xff]
        %v459 = vld [vmem:[%s248 + $0x1a8] sm:$0xff]
        %v460 = vld [vmem:[%s248 + $0x1b0] sm:$0xff]
        %v461 = vld [vmem:[%s248 + $0x1b8] sm:$0xff]
        %v462 = vld [vmem:[%s248 + $0x1c0] sm:$0xff]
        %v463 = vld [vmem:[%s248 + $0x1c8] sm:$0xff]
        %v464 = vld [vmem:[%s248 + $0x1d0] sm:$0xff]
        %v465 = vld [vmem:[%s248 + $0x1d8] sm:$0xff]
        %v466 = vld [vmem:[%s248 + $0x1e0] sm:$0xff]
        %v467 = vld [vmem:[%s248 + $0x1e8] sm:$0xff]
        %v468 = vld [vmem:[%s248 + $0x1f0] sm:$0xff]
        %v469 = vld [vmem:[%s248 + $0x1f8] sm:$0xff]
        %v470 = vld [vmem:[%s248 + $0x200] sm:$0xff]
        %v471 = vld [vmem:[%s248 + $0x208] sm:$0xff]
        %v472 = vld [vmem:[%s248 + $0x210] sm:$0xff]
        %v473 = vld [vmem:[%s248 + $0x218] sm:$0xff]
        %v474 = vld [vmem:[%s248 + $0x220] sm:$0xff]
        %v475 = vld [vmem:[%s248 + $0x228] sm:$0xff]
        %v476 = vld [vmem:[%s248 + $0x230] sm:$0xff]
        %v477 = vld [vmem:[%s248 + $0x238] sm:$0xff]
        %v478 = vld [vmem:[%s248 + $0x240] sm:$0xff]
        %v479 = vld [vmem:[%s248 + $0x248] sm:$0xff]
        %v480 = vld [vmem:[%s248 + $0x250] sm:$0xff]
        %v481 = vld [vmem:[%s248 + $0x258] sm:$0xff]
        %v482 = vld [vmem:[%s248 + $0x260] sm:$0xff]
        %v483 = vld [vmem:[%s248 + $0x268] sm:$0xff]
        %v484 = vld [vmem:[%s248 + $0x270] sm:$0xff]
        %v485 = vld [vmem:[%s248 + $0x278] sm:$0xff]
        %v486 = vld [vmem:[%s248 + $0x280] sm:$0xff]
        %v487 = vld [vmem:[%s248 + $0x288] sm:$0xff]
        %v488 = vld [vmem:[%s248 + $0x290] sm:$0xff]
        %v489 = vld [vmem:[%s248 + $0x298] sm:$0xff]
        %v490 = vld [vmem:[%s248 + $0x2a0] sm:$0xff]
        %v491 = vld [vmem:[%s248 + $0x2a8] sm:$0xff]
        %v492 = vld [vmem:[%s248 + $0x2b0] sm:$0xff]
        %v493 = vld [vmem:[%s248 + $0x2b8] sm:$0xff]
        %v494 = vld [vmem:[%s248 + $0x2c0] sm:$0xff]
        %v495 = vld [vmem:[%s248 + $0x2c8] sm:$0xff]
        %v496 = vld [vmem:[%s248 + $0x2d0] sm:$0xff]
        %v497 = vld [vmem:[%s248 + $0x2d8] sm:$0xff]
        %v498 = vmax.f32 %v314, %v406
        %v499 = vmax.f32 %v315, %v407
        %v500 = vmax.f32 %v316, %v408
        %v501 = vmax.f32 %v317, %v409
        %v502 = vmax.f32 %v318, %v410
        %v503 = vmax.f32 %v319, %v411
        %v504 = vmax.f32 %v320, %v412
        %v505 = vmax.f32 %v321, %v413
        %v506 = vmax.f32 %v322, %v414
        %v507 = vmax.f32 %v323, %v415
        %v508 = vmax.f32 %v324, %v416
        %v509 = vmax.f32 %v325, %v417
        %v510 = vmax.f32 %v326, %v418
        %v511 = vmax.f32 %v327, %v419
        %v512 = vmax.f32 %v328, %v420
        %v513 = vmax.f32 %v329, %v421
        %v514 = vmax.f32 %v330, %v422
        %v515 = vmax.f32 %v331, %v423
        %v516 = vmax.f32 %v332, %v424
        %v517 = vmax.f32 %v333, %v425
        %v518 = vmax.f32 %v334, %v426
        %v519 = vmax.f32 %v335, %v427
        %v520 = vmax.f32 %v336, %v428
        %v521 = vmax.f32 %v337, %v429
        %v522 = vmax.f32 %v338, %v430
        %v523 = vmax.f32 %v339, %v431
        %v524 = vmax.f32 %v340, %v432
        %v525 = vmax.f32 %v341, %v433
        %v526 = vmax.f32 %v342, %v434
        %v527 = vmax.f32 %v343, %v435
        %v528 = vmax.f32 %v344, %v436
        %v529 = vmax.f32 %v345, %v437
        %v530 = vmax.f32 %v346, %v438
        %v531 = vmax.f32 %v347, %v439
        %v532 = vmax.f32 %v348, %v440
        %v533 = vmax.f32 %v349, %v441
        %v534 = vmax.f32 %v350, %v442
        %v535 = vmax.f32 %v351, %v443
        %v536 = vmax.f32 %v352, %v444
        %v537 = vmax.f32 %v353, %v445
        %v538 = vmax.f32 %v354, %v446
        %v539 = vmax.f32 %v355, %v447
        %v540 = vmax.f32 %v356, %v448
        %v541 = vmax.f32 %v357, %v449
        %v542 = vmax.f32 %v358, %v450
        %v543 = vmax.f32 %v359, %v451
        %v544 = vmax.f32 %v360, %v452
        %v545 = vmax.f32 %v361, %v453
        %v546 = vmax.f32 %v362, %v454
        %v547 = vmax.f32 %v363, %v455
        %v548 = vmax.f32 %v364, %v456
        %v549 = vmax.f32 %v365, %v457
        %v550 = vmax.f32 %v366, %v458
        %v551 = vmax.f32 %v367, %v459
        %v552 = vmax.f32 %v368, %v460
        %v553 = vmax.f32 %v369, %v461
        %v554 = vmax.f32 %v370, %v462
        %v555 = vmax.f32 %v371, %v463
        %v556 = vmax.f32 %v372, %v464
        %v557 = vmax.f32 %v373, %v465
        %v558 = vmax.f32 %v374, %v466
        %v559 = vmax.f32 %v375, %v467
        %v560 = vmax.f32 %v376, %v468
        %v561 = vmax.f32 %v377, %v469
        %v562 = vmax.f32 %v378, %v470
        %v563 = vmax.f32 %v379, %v471
        %v564 = vmax.f32 %v380, %v472
        %v565 = vmax.f32 %v381, %v473
        %v566 = vmax.f32 %v382, %v474
        %v567 = vmax.f32 %v383, %v475
        %v568 = vmax.f32 %v384, %v476
        %v569 = vmax.f32 %v385, %v477
        %v570 = vmax.f32 %v386, %v478
        %v571 = vmax.f32 %v387, %v479
        %v572 = vmax.f32 %v388, %v480
        %v573 = vmax.f32 %v389, %v481
        %v574 = vmax.f32 %v390, %v482
        %v575 = vmax.f32 %v391, %v483
        %v576 = vmax.f32 %v392, %v484
        %v577 = vmax.f32 %v393, %v485
        %v578 = vmax.f32 %v394, %v486
        %v579 = vmax.f32 %v395, %v487
        %v580 = vmax.f32 %v396, %v488
        %v581 = vmax.f32 %v397, %v489
        %v582 = vmax.f32 %v398, %v490
        %v583 = vmax.f32 %v399, %v491
        %v584 = vmax.f32 %v400, %v492
        %v585 = vmax.f32 %v401, %v493
        %v586 = vmax.f32 %v402, %v494
        %v587 = vmax.f32 %v403, %v495
        %v588 = vmax.f32 %v404, %v496
        %v589 = vmax.f32 %v405, %v497
        %v590 = vld [vmem:[%s257] sm:$0xff]
        %v591 = vld [vmem:[%s257 + $0x8] sm:$0xff]
        %v592 = vld [vmem:[%s257 + $0x10] sm:$0xff]
        %v593 = vld [vmem:[%s257 + $0x18] sm:$0xff]
        %v594 = vld [vmem:[%s257 + $0x20] sm:$0xff]
        %v595 = vld [vmem:[%s257 + $0x28] sm:$0xff]
        %v596 = vld [vmem:[%s257 + $0x30] sm:$0xff]
        %v597 = vld [vmem:[%s257 + $0x38] sm:$0xff]
        %v598 = vld [vmem:[%s257 + $0x40] sm:$0xff]
        %v599 = vld [vmem:[%s257 + $0x48] sm:$0xff]
        %v600 = vld [vmem:[%s257 + $0x50] sm:$0xff]
        %v601 = vld [vmem:[%s257 + $0x58] sm:$0xff]
        %v602 = vld [vmem:[%s257 + $0x60] sm:$0xff]
        %v603 = vld [vmem:[%s257 + $0x68] sm:$0xff]
        %v604 = vld [vmem:[%s257 + $0x70] sm:$0xff]
        %v605 = vld [vmem:[%s257 + $0x78] sm:$0xff]
        %v606 = vld [vmem:[%s257 + $0x80] sm:$0xff]
        %v607 = vld [vmem:[%s257 + $0x88] sm:$0xff]
        %v608 = vld [vmem:[%s257 + $0x90] sm:$0xff]
        %v609 = vld [vmem:[%s257 + $0x98] sm:$0xff]
        %v610 = vld [vmem:[%s257 + $0xa0] sm:$0xff]
        %v611 = vld [vmem:[%s257 + $0xa8] sm:$0xff]
        %v612 = vld [vmem:[%s257 + $0xb0] sm:$0xff]
        %v613 = vld [vmem:[%s257 + $0xb8] sm:$0xff]
        %v614 = vld [vmem:[%s257 + $0xc0] sm:$0xff]
        %v615 = vld [vmem:[%s257 + $0xc8] sm:$0xff]
        %v616 = vld [vmem:[%s257 + $0xd0] sm:$0xff]
        %v617 = vld [vmem:[%s257 + $0xd8] sm:$0xff]
        %v618 = vld [vmem:[%s257 + $0xe0] sm:$0xff]
        %v619 = vld [vmem:[%s257 + $0xe8] sm:$0xff]
        %v620 = vld [vmem:[%s257 + $0xf0] sm:$0xff]
        %v621 = vld [vmem:[%s257 + $0xf8] sm:$0xff]
        %v622 = vld [vmem:[%s257 + $0x100] sm:$0xff]
        %v623 = vld [vmem:[%s257 + $0x108] sm:$0xff]
        %v624 = vld [vmem:[%s257 + $0x110] sm:$0xff]
        %v625 = vld [vmem:[%s257 + $0x118] sm:$0xff]
        %v626 = vld [vmem:[%s257 + $0x120] sm:$0xff]
        %v627 = vld [vmem:[%s257 + $0x128] sm:$0xff]
        %v628 = vld [vmem:[%s257 + $0x130] sm:$0xff]
        %v629 = vld [vmem:[%s257 + $0x138] sm:$0xff]
        %v630 = vld [vmem:[%s257 + $0x140] sm:$0xff]
        %v631 = vld [vmem:[%s257 + $0x148] sm:$0xff]
        %v632 = vld [vmem:[%s257 + $0x150] sm:$0xff]
        %v633 = vld [vmem:[%s257 + $0x158] sm:$0xff]
        %v634 = vld [vmem:[%s257 + $0x160] sm:$0xff]
        %v635 = vld [vmem:[%s257 + $0x168] sm:$0xff]
        %v636 = vld [vmem:[%s257 + $0x170] sm:$0xff]
        %v637 = vld [vmem:[%s257 + $0x178] sm:$0xff]
        %v638 = vld [vmem:[%s257 + $0x180] sm:$0xff]
        %v639 = vld [vmem:[%s257 + $0x188] sm:$0xff]
        %v640 = vld [vmem:[%s257 + $0x190] sm:$0xff]
        %v641 = vld [vmem:[%s257 + $0x198] sm:$0xff]
        %v642 = vld [vmem:[%s257 + $0x1a0] sm:$0xff]
        %v643 = vld [vmem:[%s257 + $0x1a8] sm:$0xff]
        %v644 = vld [vmem:[%s257 + $0x1b0] sm:$0xff]
        %v645 = vld [vmem:[%s257 + $0x1b8] sm:$0xff]
        %v646 = vld [vmem:[%s257 + $0x1c0] sm:$0xff]
        %v647 = vld [vmem:[%s257 + $0x1c8] sm:$0xff]
        %v648 = vld [vmem:[%s257 + $0x1d0] sm:$0xff]
        %v649 = vld [vmem:[%s257 + $0x1d8] sm:$0xff]
        %v650 = vld [vmem:[%s257 + $0x1e0] sm:$0xff]
        %v651 = vld [vmem:[%s257 + $0x1e8] sm:$0xff]
        %v652 = vld [vmem:[%s257 + $0x1f0] sm:$0xff]
        %v653 = vld [vmem:[%s257 + $0x1f8] sm:$0xff]
        %v654 = vld [vmem:[%s257 + $0x200] sm:$0xff]
        %v655 = vld [vmem:[%s257 + $0x208] sm:$0xff]
        %v656 = vld [vmem:[%s257 + $0x210] sm:$0xff]
        %v657 = vld [vmem:[%s257 + $0x218] sm:$0xff]
        %v658 = vld [vmem:[%s257 + $0x220] sm:$0xff]
        %v659 = vld [vmem:[%s257 + $0x228] sm:$0xff]
        %v660 = vld [vmem:[%s257 + $0x230] sm:$0xff]
        %v661 = vld [vmem:[%s257 + $0x238] sm:$0xff]
        %v662 = vld [vmem:[%s257 + $0x240] sm:$0xff]
        %v663 = vld [vmem:[%s257 + $0x248] sm:$0xff]
        %v664 = vld [vmem:[%s257 + $0x250] sm:$0xff]
        %v665 = vld [vmem:[%s257 + $0x258] sm:$0xff]
        %v666 = vld [vmem:[%s257 + $0x260] sm:$0xff]
        %v667 = vld [vmem:[%s257 + $0x268] sm:$0xff]
        %v668 = vld [vmem:[%s257 + $0x270] sm:$0xff]
        %v669 = vld [vmem:[%s257 + $0x278] sm:$0xff]
        %v670 = vld [vmem:[%s257 + $0x280] sm:$0xff]
        %v671 = vld [vmem:[%s257 + $0x288] sm:$0xff]
        %v672 = vld [vmem:[%s257 + $0x290] sm:$0xff]
        %v673 = vld [vmem:[%s257 + $0x298] sm:$0xff]
        %v674 = vld [vmem:[%s257 + $0x2a0] sm:$0xff]
        %v675 = vld [vmem:[%s257 + $0x2a8] sm:$0xff]
        %v676 = vld [vmem:[%s257 + $0x2b0] sm:$0xff]
        %v677 = vld [vmem:[%s257 + $0x2b8] sm:$0xff]
        %v678 = vld [vmem:[%s257 + $0x2c0] sm:$0xff]
        %v679 = vld [vmem:[%s257 + $0x2c8] sm:$0xff]
        %v680 = vld [vmem:[%s257 + $0x2d0] sm:$0xff]
        %v681 = vld [vmem:[%s257 + $0x2d8] sm:$0xff]
        %v682 = vmax.f32 %v498, %v590
        %v683 = vmax.f32 %v499, %v591
        %v684 = vmax.f32 %v500, %v592
        %v685 = vmax.f32 %v501, %v593
        %v686 = vmax.f32 %v502, %v594
        %v687 = vmax.f32 %v503, %v595
        %v688 = vmax.f32 %v504, %v596
        %v689 = vmax.f32 %v505, %v597
        %v690 = vmax.f32 %v506, %v598
        %v691 = vmax.f32 %v507, %v599
        %v692 = vmax.f32 %v508, %v600
        %v693 = vmax.f32 %v509, %v601
        %v694 = vmax.f32 %v510, %v602
        %v695 = vmax.f32 %v511, %v603
        %v696 = vmax.f32 %v512, %v604
        %v697 = vmax.f32 %v513, %v605
        %v698 = vmax.f32 %v514, %v606
        %v699 = vmax.f32 %v515, %v607
        %v700 = vmax.f32 %v516, %v608
        %v701 = vmax.f32 %v517, %v609
        %v702 = vmax.f32 %v518, %v610
        %v703 = vmax.f32 %v519, %v611
        %v704 = vmax.f32 %v520, %v612
        %v705 = vmax.f32 %v521, %v613
        %v706 = vmax.f32 %v522, %v614
        %v707 = vmax.f32 %v523, %v615
        %v708 = vmax.f32 %v524, %v616
        %v709 = vmax.f32 %v525, %v617
        %v710 = vmax.f32 %v526, %v618
        %v711 = vmax.f32 %v527, %v619
        %v712 = vmax.f32 %v528, %v620
        %v713 = vmax.f32 %v529, %v621
        %v714 = vmax.f32 %v530, %v622
        %v715 = vmax.f32 %v531, %v623
        %v716 = vmax.f32 %v532, %v624
        %v717 = vmax.f32 %v533, %v625
        %v718 = vmax.f32 %v534, %v626
        %v719 = vmax.f32 %v535, %v627
        %v720 = vmax.f32 %v536, %v628
        %v721 = vmax.f32 %v537, %v629
        %v722 = vmax.f32 %v538, %v630
        %v723 = vmax.f32 %v539, %v631
        %v724 = vmax.f32 %v540, %v632
        %v725 = vmax.f32 %v541, %v633
        %v726 = vmax.f32 %v542, %v634
        %v727 = vmax.f32 %v543, %v635
        %v728 = vmax.f32 %v544, %v636
        %v729 = vmax.f32 %v545, %v637
        %v730 = vmax.f32 %v546, %v638
        %v731 = vmax.f32 %v547, %v639
        %v732 = vmax.f32 %v548, %v640
        %v733 = vmax.f32 %v549, %v641
        %v734 = vmax.f32 %v550, %v642
        %v735 = vmax.f32 %v551, %v643
        %v736 = vmax.f32 %v552, %v644
        %v737 = vmax.f32 %v553, %v645
        %v738 = vmax.f32 %v554, %v646
        %v739 = vmax.f32 %v555, %v647
        %v740 = vmax.f32 %v556, %v648
        %v741 = vmax.f32 %v557, %v649
        %v742 = vmax.f32 %v558, %v650
        %v743 = vmax.f32 %v559, %v651
        %v744 = vmax.f32 %v560, %v652
        %v745 = vmax.f32 %v561, %v653
        %v746 = vmax.f32 %v562, %v654
        %v747 = vmax.f32 %v563, %v655
        %v748 = vmax.f32 %v564, %v656
        %v749 = vmax.f32 %v565, %v657
        %v750 = vmax.f32 %v566, %v658
        %v751 = vmax.f32 %v567, %v659
        %v752 = vmax.f32 %v568, %v660
        %v753 = vmax.f32 %v569, %v661
        %v754 = vmax.f32 %v570, %v662
        %v755 = vmax.f32 %v571, %v663
        %v756 = vmax.f32 %v572, %v664
        %v757 = vmax.f32 %v573, %v665
        %v758 = vmax.f32 %v574, %v666
        %v759 = vmax.f32 %v575, %v667
        %v760 = vmax.f32 %v576, %v668
        %v761 = vmax.f32 %v577, %v669
        %v762 = vmax.f32 %v578, %v670
        %v763 = vmax.f32 %v579, %v671
        %v764 = vmax.f32 %v580, %v672
        %v765 = vmax.f32 %v581, %v673
        %v766 = vmax.f32 %v582, %v674
        %v767 = vmax.f32 %v583, %v675
        %v768 = vmax.f32 %v584, %v676
        %v769 = vmax.f32 %v585, %v677
        %v770 = vmax.f32 %v586, %v678
        %v771 = vmax.f32 %v587, %v679
        %v772 = vmax.f32 %v588, %v680
        %v773 = vmax.f32 %v589, %v681
        %774 = vst [vmem:[%s289] sm:$0xff] %v682
        %775 = vst [vmem:[%s289 + $0x8] sm:$0xff] %v683
        %776 = vst [vmem:[%s289 + $0x10] sm:$0xff] %v684
        %777 = vst [vmem:[%s289 + $0x18] sm:$0xff] %v685
        %778 = vst [vmem:[%s289 + $0x20] sm:$0xff] %v686
        %779 = vst [vmem:[%s289 + $0x28] sm:$0xff] %v687
        %780 = vst [vmem:[%s289 + $0x30] sm:$0xff] %v688
        %781 = vst [vmem:[%s289 + $0x38] sm:$0xff] %v689
        %782 = vst [vmem:[%s289 + $0x40] sm:$0xff] %v690
        %783 = vst [vmem:[%s289 + $0x48] sm:$0xff] %v691
        %784 = vst [vmem:[%s289 + $0x50] sm:$0xff] %v692
        %785 = vst [vmem:[%s289 + $0x58] sm:$0xff] %v693
        %786 = vst [vmem:[%s289 + $0x60] sm:$0xff] %v694
        %787 = vst [vmem:[%s289 + $0x68] sm:$0xff] %v695
        %788 = vst [vmem:[%s289 + $0x70] sm:$0xff] %v696
        %789 = vst [vmem:[%s289 + $0x78] sm:$0xff] %v697
        %790 = vst [vmem:[%s289 + $0x80] sm:$0xff] %v698
        %791 = vst [vmem:[%s289 + $0x88] sm:$0xff] %v699
        %792 = vst [vmem:[%s289 + $0x90] sm:$0xff] %v700
        %793 = vst [vmem:[%s289 + $0x98] sm:$0xff] %v701
        %794 = vst [vmem:[%s289 + $0xa0] sm:$0xff] %v702
        %795 = vst [vmem:[%s289 + $0xa8] sm:$0xff] %v703
        %796 = vst [vmem:[%s289 + $0xb0] sm:$0xff] %v704
        %797 = vst [vmem:[%s289 + $0xb8] sm:$0xff] %v705
        %798 = vst [vmem:[%s289 + $0xc0] sm:$0xff] %v706
        %799 = vst [vmem:[%s289 + $0xc8] sm:$0xff] %v707
        %800 = vst [vmem:[%s289 + $0xd0] sm:$0xff] %v708
        %801 = vst [vmem:[%s289 + $0xd8] sm:$0xff] %v709
        %802 = vst [vmem:[%s289 + $0xe0] sm:$0xff] %v710
        %803 = vst [vmem:[%s289 + $0xe8] sm:$0xff] %v711
        %804 = vst [vmem:[%s289 + $0xf0] sm:$0xff] %v712
        %805 = vst [vmem:[%s289 + $0xf8] sm:$0xff] %v713
        %806 = vst [vmem:[%s289 + $0x100] sm:$0xff] %v714
        %807 = vst [vmem:[%s289 + $0x108] sm:$0xff] %v715
        %808 = vst [vmem:[%s289 + $0x110] sm:$0xff] %v716
        %809 = vst [vmem:[%s289 + $0x118] sm:$0xff] %v717
        %810 = vst [vmem:[%s289 + $0x120] sm:$0xff] %v718
        %811 = vst [vmem:[%s289 + $0x128] sm:$0xff] %v719
        %812 = vst [vmem:[%s289 + $0x130] sm:$0xff] %v720
        %813 = vst [vmem:[%s289 + $0x138] sm:$0xff] %v721
        %814 = vst [vmem:[%s289 + $0x140] sm:$0xff] %v722
        %815 = vst [vmem:[%s289 + $0x148] sm:$0xff] %v723
        %816 = vst [vmem:[%s289 + $0x150] sm:$0xff] %v724
        %817 = vst [vmem:[%s289 + $0x158] sm:$0xff] %v725
        %818 = vst [vmem:[%s289 + $0x160] sm:$0xff] %v726
        %819 = vst [vmem:[%s289 + $0x168] sm:$0xff] %v727
        %820 = vst [vmem:[%s289 + $0x170] sm:$0xff] %v728
        %821 = vst [vmem:[%s289 + $0x178] sm:$0xff] %v729
        %822 = vst [vmem:[%s289 + $0x180] sm:$0xff] %v730
        %823 = vst [vmem:[%s289 + $0x188] sm:$0xff] %v731
        %824 = vst [vmem:[%s289 + $0x190] sm:$0xff] %v732
        %825 = vst [vmem:[%s289 + $0x198] sm:$0xff] %v733
        %826 = vst [vmem:[%s289 + $0x1a0] sm:$0xff] %v734
        %827 = vst [vmem:[%s289 + $0x1a8] sm:$0xff] %v735
        %828 = vst [vmem:[%s289 + $0x1b0] sm:$0xff] %v736
        %829 = vst [vmem:[%s289 + $0x1b8] sm:$0xff] %v737
        %830 = vst [vmem:[%s289 + $0x1c0] sm:$0xff] %v738
        %831 = vst [vmem:[%s289 + $0x1c8] sm:$0xff] %v739
        %832 = vst [vmem:[%s289 + $0x1d0] sm:$0xff] %v740
        %833 = vst [vmem:[%s289 + $0x1d8] sm:$0xff] %v741
        %834 = vst [vmem:[%s289 + $0x1e0] sm:$0xff] %v742
        %835 = vst [vmem:[%s289 + $0x1e8] sm:$0xff] %v743
        %836 = vst [vmem:[%s289 + $0x1f0] sm:$0xff] %v744
        %837 = vst [vmem:[%s289 + $0x1f8] sm:$0xff] %v745
        %838 = vst [vmem:[%s289 + $0x200] sm:$0xff] %v746
        %839 = vst [vmem:[%s289 + $0x208] sm:$0xff] %v747
        %840 = vst [vmem:[%s289 + $0x210] sm:$0xff] %v748
        %841 = vst [vmem:[%s289 + $0x218] sm:$0xff] %v749
        %842 = vst [vmem:[%s289 + $0x220] sm:$0xff] %v750
        %843 = vst [vmem:[%s289 + $0x228] sm:$0xff] %v751
        %844 = vst [vmem:[%s289 + $0x230] sm:$0xff] %v752
        %845 = vst [vmem:[%s289 + $0x238] sm:$0xff] %v753
        %846 = vst [vmem:[%s289 + $0x240] sm:$0xff] %v754
        %847 = vst [vmem:[%s289 + $0x248] sm:$0xff] %v755
        %848 = vst [vmem:[%s289 + $0x250] sm:$0xff] %v756
        %849 = vst [vmem:[%s289 + $0x258] sm:$0xff] %v757
        %850 = vst [vmem:[%s289 + $0x260] sm:$0xff] %v758
        %851 = vst [vmem:[%s289 + $0x268] sm:$0xff] %v759
        %852 = vst [vmem:[%s289 + $0x270] sm:$0xff] %v760
        %853 = vst [vmem:[%s289 + $0x278] sm:$0xff] %v761
        %854 = vst [vmem:[%s289 + $0x280] sm:$0xff] %v762
        %855 = vst [vmem:[%s289 + $0x288] sm:$0xff] %v763
        %856 = vst [vmem:[%s289 + $0x290] sm:$0xff] %v764
        %857 = vst [vmem:[%s289 + $0x298] sm:$0xff] %v765
        %858 = vst [vmem:[%s289 + $0x2a0] sm:$0xff] %v766
        %859 = vst [vmem:[%s289 + $0x2a8] sm:$0xff] %v767
        %860 = vst [vmem:[%s289 + $0x2b0] sm:$0xff] %v768
        %861 = vst [vmem:[%s289 + $0x2b8] sm:$0xff] %v769
        %862 = vst [vmem:[%s289 + $0x2c0] sm:$0xff] %v770
        %863 = vst [vmem:[%s289 + $0x2c8] sm:$0xff] %v771
        %864 = vst [vmem:[%s289 + $0x2d0] sm:$0xff] %v772
        %865 = vst [vmem:[%s289 + $0x2d8] sm:$0xff] %v773
        %s866 = sand.u32 %s109, 1
        %s867 = scalar_lea.sflag [#allocation4], %s866
        %s868 = sand.u32 %s109, 1
        %s869 = smul.addr %s868, 736
        %s870 = scalar_lea.vmem [#allocation8], %s869
        // Predicated region
        $region45: #{tpu_custom_call.1} parent=31 // pred_check
          %p871 = pneg %p119
        $region46: #{tpu_custom_call.1} parent=31 // pred_check_branch
          %873 = sbr.rel (%p871) target = $region48
        $region47: #{tpu_custom_call.1} parent=31 // pred_region
          %s874 = smul.u32 23, %s23
          %s875 = ssub.s32 180, %s874
          %p876 = scmp.lt.s32.totalorder %s875, 23
          %s877 = scalar_select %p876, %s875, 23
          %s878 = smul.u32 128, %s877
          %s879 = smul.u32 %s878, 4
          %s881 = ssub.s32 11776, %s879
          %882 = vsyncadd %s867, %s881
          %p883 = scmp.ne.s32.totalorder 0, %s879
          %s884 = smul.addr %s874, 4
          %s885 = smul.addr %s884, 128
          %s886 = scalar_lea.hbm %s3, %s885
          %s887 = smul.u32 32, %s877
          %s888 = sshll.u32 %s870, 4
          %s889 = int_to_ptr.vmem [resolvable:$true] %s888
          %s890 = sshll.u32 %s887, 4
          %894 = dma.vmem_to_hbm [thread:$0]  (%p883), %s889, %s890, %s886, %s867, 512, 512, 32
        $region48: #{tpu_custom_call.1} parent=31 // pred_fallthru
          _
      $region32: #{tpu_custom_call.1} parent=5 // pred_fallthru
        _
      %p895 = scmp.le.s32.totalorder 2, %s18
      // Predicated region
      $region49: #{tpu_custom_call.1} parent=5 // pred_check
        %p896 = pneg %p895
      $region50: #{tpu_custom_call.1} parent=5 // pred_check_branch
        %898 = sbr.rel (%p896) target = $region52
      $region51: #{tpu_custom_call.1} parent=5 // pred_region
        %s899 = ssub.s32 %s18, 2
        // Predicated region
        $region53: #{tpu_custom_call.1} parent=51 // pred_check
          %p900 = pneg %p125
        $region54: #{tpu_custom_call.1} parent=51 // pred_check_branch
          %902 = sbr.rel (%p900) target = $region56
        $region55: #{tpu_custom_call.1} parent=51 // pred_region
          %s903 = sand.u32 %s110, 1
          %s904 = scalar_lea.sflag [#allocation4], %s903
          %s905 = sand.u32 %s110, 1
          %s906 = smul.addr %s905, 736
          %s907 = scalar_lea.vmem [#allocation8], %s906
          %908 = dma.done %s904, 11776
        $region56: #{tpu_custom_call.1} parent=51 // pred_fallthru
          _
      $region52: #{tpu_custom_call.1} parent=5 // pred_fallthru
        _
    $region6: #{tpu_custom_call.1} parent=1 // loop_footer
      %s22 = sadd.s32 1, %s18
    $region7: #{tpu_custom_call.1} parent=1 // loop_footer_branch
      %17 = sbr.rel target = $region3
    $region8: #{tpu_custom_call.1} parent=1 // loop_exit
      _
    %909 = vsyncpa [#allocation3], 1
    %s910 = scalar_lea.sflag [#allocation3], 1
    %911 = vsyncpa %s910, 1
    %912 = vsyncpa [#allocation6], 1
    %s913 = scalar_lea.sflag [#allocation6], 1
    %914 = vsyncpa %s913, 1
    %915 = vsyncpa [#allocation4], 1
    %s916 = scalar_lea.sflag [#allocation4], 1
    %917 = vsyncpa %s916, 1

</llo_original>
